<compile_context>
chip_gen: v5e
topology: v5e:2x2
jax: 0.10.0
libtpu: 0.0.40
codegen_flags: <defaults>
</compile_context>

<pallas_src>
import jax
import jax.numpy as jnp
from jax.experimental import pallas as pl
from jax.experimental.pallas import tpu as pltpu


def _conv1x1_relu_kernel(x_ref, w_ref, b_ref, o_ref):
    # x_ref: (C, TILE_N)      one batch element's lane tile (batch dim squeezed)
    # w_ref: (C_out, C)       1x1 conv weight (trailing 1x1 squeezed), VMEM-resident
    # b_ref: (C_out, 1)       bias, f32, VMEM-resident
    # o_ref: (C_out, TILE_N)
    y = jnp.dot(w_ref[...], x_ref[...], preferred_element_type=jnp.float32)
    y = y + b_ref[...]                      # f32 epilogue (v5e VPU has no bf16)
    o_ref[...] = jnp.maximum(y, 0.0).astype(o_ref.dtype)


def _ceil_div(a, b):
    return -(-a // b)


def _choose_tile_n(N, B, cap, *, min_tile=8192, min_total_steps=8):
    """Pick the lane-tile size.

    Goals (per perf review):
      * per-step HBM traffic well above the ~0.35 us/step fixed overhead
        => tile_n >= min_tile lanes, and as large as `cap` allows;
      * >= ~min_total_steps grid steps overall so both v7x TensorCores get
        3-4 steps each and the DMA pipeline overlaps read/compute/writeback;
      * multiple of 128, preferably an exact divisor of N (lane-dense,
        unmasked vst every step, no ragged last block).
    """
    cap = max(128, (cap // 128) * 128)
    if N <= min_tile:
        return N            # tiny input: one full-dim tile (always a legal block)
    want_n_steps = max(1, _ceil_div(min_total_steps, max(B, 1)))
    tile_n = _ceil_div(_ceil_div(N, want_n_steps), 128) * 128
    tile_n = min(cap, max(min_tile, tile_n))
    if tile_n >= N:
        return N            # full-dim block, legal regardless of 128-alignment
    if N % tile_n:
        # prefer the largest multiple of 128 <= tile_n that divides N exactly
        for cand in range(tile_n, min_tile - 1, -128):
            if N % cand == 0:
                return cand
    return tile_n


def slicewise_forward(xs, weight, bias, axis=-1, *, max_tile_n=65536,
                      storage_dtype=None):
    """SliceWise(Conv2d(C, C_out, 1) + ReLU) forward.

    xs:            (B, C, *spatial..., S), slice axis at `axis` (any dim >= 2).
                   Channel dim is dim 1 (NCHW-per-slice, as the wrapped Conv2d implies).
    weight:        (C_out, C)   1x1 conv weight with the trailing 1x1 squeezed
    bias:          (C_out,)
    storage_dtype: optional HBM storage dtype (e.g. jnp.bfloat16) for the
                   activations/weight; accumulation + epilogue stay f32.
    returns same layout as xs with C replaced by C_out.
    """
    ndim = xs.ndim
    ax = axis % ndim
    if ax < 2:
        raise ValueError("slice axis must not be the batch or channel dim")
    # NOTE: `axis` is only validated, never used for a permutation — a 1x1 conv
    # contracts only over channels, so it commutes with SliceWise's
    # moveaxis/fold/unfold.  This shortcut does NOT hold for a non-1x1 network.

    B, C = xs.shape[0], xs.shape[1]
    rest = xs.shape[2:]
    N = 1
    for d in rest:
        N *= d
    C_out = weight.shape[0]

    dt = jnp.dtype(storage_dtype) if storage_dtype is not None else xs.dtype
    x = xs.reshape(B, C, N).astype(dt)          # free reshape: trailing dims only
    w = weight.astype(dt)
    b2d = bias.reshape(C_out, 1).astype(jnp.float32)

    tile_n = _choose_tile_n(N, B, max_tile_n)
    grid = (B, pl.cdiv(N, tile_n))

    cost = pl.CostEstimate(
        flops=2 * B * C * C_out * N,
        transcendentals=0,
        bytes_accessed=(B * C * N * x.dtype.itemsize
                        + B * C_out * N * jnp.dtype(dt).itemsize
                        + C_out * C * w.dtype.itemsize
                        + C_out * b2d.dtype.itemsize),
    )

    out = pl.pallas_call(
        _conv1x1_relu_kernel,
        out_shape=jax.ShapeDtypeStruct((B, C_out, N), dt),
        grid_spec=pl.GridSpec(
            grid=grid,
            in_specs=[
                pl.BlockSpec((pl.Squeezed(), C, tile_n), lambda b, n: (b, 0, n)),
                pl.BlockSpec((C_out, C), lambda b, n: (0, 0)),
                pl.BlockSpec((C_out, 1), lambda b, n: (0, 0)),
            ],
            out_specs=pl.BlockSpec((pl.Squeezed(), C_out, tile_n),
                                   lambda b, n: (b, 0, n)),
        ),
        compiler_params=pltpu.CompilerParams(
            dimension_semantics=("parallel", "parallel"),
            vmem_limit_bytes=32 * 1024 * 1024,
        ),
        cost_estimate=cost,
    )(x, w, b2d)

    # Free reshape back: unfold the merged trailing dims (no transpose needed).
    return out.reshape(B, C_out, *rest)   # squeeze_first: single output


if __name__ == "__main__":
    key = jax.random.PRNGKey(0)
    k_x, k_w, k_b = jax.random.split(key, 3)

    B, C, H, W, S = 2, 4, 16, 16, 8
    C_out = 8

    xs = jax.random.normal(k_x, (B, C, H, W, S), dtype=jnp.float32)
    weight = jax.random.normal(k_w, (C_out, C), dtype=jnp.float32) * 0.1
    bias = jax.random.normal(k_b, (C_out,), dtype=jnp.float32) * 0.1

    # Reference in plain JAX (same math: per-slice 1x1 conv + ReLU, equivalent
    # to the moveaxis/fold/unfold path of the PyTorch module).
    ref = jnp.einsum("oc,bchws->bohws", weight, xs) + bias[None, :, None, None, None]
    ref = jnp.maximum(ref, 0.0)

    # f32 storage: matches the PyTorch module's numerics.
    out = jax.block_until_ready(slicewise_forward(xs, weight, bias, axis=-1))
    assert out.shape == (B, C_out, H, W, S)
    assert jnp.allclose(out, ref, atol=1e-5, rtol=1e-5)

    # bf16 storage: halves HBM bytes on this memory-bound op (v6e/v7x lever);
    # accumulation + epilogue stay f32, so only input-rounding error remains.
    out_bf16 = jax.block_until_ready(
        slicewise_forward(xs, weight, bias, axis=-1, storage_dtype=jnp.bfloat16))
    assert out_bf16.shape == (B, C_out, H, W, S)
    assert jnp.allclose(out_bf16.astype(jnp.float32), ref, atol=3e-2, rtol=3e-2)

    print("KERNEL_OK")
</pallas_src>

<mosaic_0001>
module attributes {stable_mosaic.version = 11 : i64} {
  func.func @_conv1x1_relu_kernel(%arg0: i32, %arg1: i32, %arg2: memref<1x4x2048xf32, #tpu.memory_space<vmem>>, %arg3: memref<8x4xf32, #tpu.memory_space<vmem>>, %arg4: memref<8x1xf32, #tpu.memory_space<vmem>>, %arg5: memref<1x8x2048xf32, #tpu.memory_space<vmem>>) attributes {dimension_semantics = [#tpu.dimension_semantics<parallel>, #tpu.dimension_semantics<parallel>], iteration_bounds = array<i64: 2, 1>, scalar_prefetch = 0 : i64, scratch_operands = 0 : i64, tpu.core_type = #tpu.core_type<tc>, window_params = [{transform_indices = @transform_0, window_bounds = array<i64: 1, 4, 2048>}, {pipeline_mode = #tpu.pipeline_mode<synchronous>, transform_indices = @transform_1, window_bounds = array<i64: 8, 4>}, {pipeline_mode = #tpu.pipeline_mode<synchronous>, transform_indices = @transform_2, window_bounds = array<i64: 8, 1>}, {transform_indices = @transform_3, window_bounds = array<i64: 1, 8, 2048>}]} {
    %c0 = arith.constant 0 : index
    %c0_0 = arith.constant 0 : index
    %0 = vector.load %arg3[%c0, %c0_0] : memref<8x4xf32, #tpu.memory_space<vmem>>, vector<8x4xf32>
    %c0_1 = arith.constant 0 : index
    %c0_2 = arith.constant 0 : index
    %c0_3 = arith.constant 0 : index
    %1 = vector.load %arg2[%c0_1, %c0_2, %c0_3] : memref<1x4x2048xf32, #tpu.memory_space<vmem>>, vector<1x4x2048xf32>
    %2 = vector.shape_cast %1 : vector<1x4x2048xf32> to vector<4x2048xf32>
    %cst = arith.constant dense<0.000000e+00> : vector<8x2048xf32>
    %3 = tpu.matmul %0, %2, %cst {dimension_numbers = #tpu.dot_dimension_numbers<[1], [0], [0], [1], [0, 0, 1, 1], [], []>} : vector<8x4xf32>, vector<4x2048xf32>, vector<8x2048xf32> -> vector<8x2048xf32>
    %c0_4 = arith.constant 0 : index
    %c0_5 = arith.constant 0 : index
    %4 = vector.load %arg4[%c0_4, %c0_5] : memref<8x1xf32, #tpu.memory_space<vmem>>, vector<8x1xf32>
    %5 = vector.broadcast %4 : vector<8x1xf32> to vector<8x2048xf32>
    %6 = arith.addf %3, %5 : vector<8x2048xf32>
    %cst_6 = arith.constant 0.000000e+00 : f32
    %7 = vector.broadcast %cst_6 : f32 to vector<8x2048xf32>
    %8 = arith.maximumf %6, %7 : vector<8x2048xf32>
    %c0_7 = arith.constant 0 : index
    %c0_8 = arith.constant 0 : index
    %c0_9 = arith.constant 0 : index
    %9 = vector.load %arg5[%c0_7, %c0_8, %c0_9] : memref<1x8x2048xf32, #tpu.memory_space<vmem>>, vector<1x8x2048xf32>
    %10 = vector.shape_cast %9 : vector<1x8x2048xf32> to vector<8x2048xf32>
    %11 = vector.shape_cast %8 : vector<8x2048xf32> to vector<1x8x2048xf32>
    tpu.vector_store %arg5[%c0_7, %c0_8, %c0_9], %11 {strides = array<i32>} : memref<1x8x2048xf32, #tpu.memory_space<vmem>>, vector<1x8x2048xf32>,
    return
  }
  func.func @transform_0(%arg0: i32, %arg1: i32) -> (i32, i32, i32) {
    %c0_i32 = arith.constant 0 : i32
    %c0_i32_0 = arith.constant 0 : i32
    return %arg0, %c0_i32, %arg1 : i32, i32, i32
  }
  func.func @transform_1(%arg0: i32, %arg1: i32) -> (i32, i32) {
    %c0_i32 = arith.constant 0 : i32
    %c0_i32_0 = arith.constant 0 : i32
    %c0_i32_1 = arith.constant 0 : i32
    return %c0_i32, %c0_i32_0 : i32, i32
  }
  func.func @transform_2(%arg0: i32, %arg1: i32) -> (i32, i32) {
    %c0_i32 = arith.constant 0 : i32
    %c0_i32_0 = arith.constant 0 : i32
    %c0_i32_1 = arith.constant 0 : i32
    return %c0_i32, %c0_i32_0 : i32, i32
  }
  func.func @transform_3(%arg0: i32, %arg1: i32) -> (i32, i32, i32) {
    %c0_i32 = arith.constant 0 : i32
    %c0_i32_0 = arith.constant 0 : i32
    return %arg0, %c0_i32, %arg1 : i32, i32, i32
  }
}

</mosaic_0001>

<llo_original>
// kernel: tpu_custom_call.1
$region0: #{tpu_custom_call.1}
  #allocation0 [shape = 'u32[]', space=smem, size = 0x4, offset = 0x4, fixed_abs, tag = 'smem constant byte address 0x4 - core index']
  #allocation1 [shape = 'u32[72,128]{1,0:T(1,128)}', space=vmem, size = 0x9000, scoped, tag = 'internal scratch']
  %s0 = inlined_call_operand.hbm [shape: f32[2,4,2048], index: 0, kind: input, shape index: {}]
  %s1 = inlined_call_operand.vmem [shape: f32[8,4], index: 1, kind: input, shape index: {}]
  %s2 = inlined_call_operand.vmem [shape: f32[8,1], index: 2, kind: input, shape index: {}]
  %s3 = inlined_call_operand.hbm [shape: f32[2,8,2048], index: 3, kind: output, shape index: {}]
  %s4 = sld [smem:[#allocation0]]
  $region49: #{tpu_custom_call.1} parent=0
    _
  %s6 = ssub.s32 1, %s4
  %s7 = scalar_select 0, %s6, %s4
  $region1: #{tpu_custom_call.1} parent=0
    #allocation2 [shape = 'u8[65536]{0}', space=vmem, size = 0x10000, scoped, tag = 'input window, operand 0']
    #allocation3 [shape = 's32[2]{0}', space=sflag, size = 0x8, scoped, tag = 'scoped memory for tpu_custom_call.1']
    #allocation4 [shape = 's32[2]{0}', space=sflag, size = 0x8, scoped, tag = 'scoped memory for tpu_custom_call.1']
    #allocation5 [shape = 'u8[131072]{0}', space=vmem, size = 0x20000, scoped, tag = 'output window, operand 0']
    %8 = vsyncpa [#allocation3], 0
    %s9 = scalar_lea.sflag [#allocation3], 1
    %10 = vsyncpa %s9, 0
    %11 = vsyncpa [#allocation4], 0
    %s12 = scalar_lea.sflag [#allocation4], 1
    %13 = vsyncpa %s12, 0
    loop: start=0, step=1, limit=4
    $region2: #{tpu_custom_call.1} parent=1 // loop_pre_header
      _
    $region3: #{tpu_custom_call.1} parent=1 // loop_header
      %s15 = sphi 0, %s19
      %p16 = scmp.ge.s32.totalorder %s15, 4
      %s22 = sphi 0, %s34
      %s23 = sphi 0, %s30
      %s24 = sphi 0, %s22
      %s25 = sphi 0, %s23
      %s26 = sphi 0, %s24
      %s27 = sphi 0, %s25
      %s39 = sphi 0, %s41
      %s42 = sphi 0, %s39
      %s43 = sphi 0, %s42
      %s59 = sphi 0, %s43
      %s63 = sphi 0, %s63
      %s65 = sphi 0, %s63
      %s66 = sphi 0, %s65
      %s80 = sphi 0, %s66
      %s84 = sphi 0, %s84
      %s86 = sphi 0, %s84
      %s87 = sphi 0, %s86
      %s101 = sphi 0, %s87
      %s109 = sphi 0, %s111
      %s112 = sphi 0, %s109
      %s113 = sphi 0, %s112
      %s129 = sphi 0, %s113
    $region4: #{tpu_custom_call.1} parent=1 // loop_header_branch
      %18 = sbr.rel (%p16) target = $region8
    $region5: #{tpu_custom_call.1} parent=1 // loop_body
      %s20 = ssub.s32 %s15, 1
      %s21 = ssub.s32 %s15, 2
      %s28 = sadd.s32 1, %s23
      %p29 = scmp.ge.s32.totalorder %s28, 1
      %s30 = scalar_select %p29, 0, %s28
      %s31 = sadd.s32 1, %s22
      %s32 = scalar_select %p29, %s31, %s22
      %p33 = scmp.ge.s32.totalorder %s32, 2
      %s34 = scalar_select %p33, 0, %s32
      %s35 = ssub.s32 %s22, %s34
      %s36 = ssub.s32 %s23, %s30
      %s37 = sor.u32 %s35, %s36
      %p38 = scmp.eq.s32.totalorder %s37, 0
      %s40 = sadd.s32 %s39, 1
      %s41 = scalar_select %p38, %s39, %s40
      %p44 = pneg %p38
      %p45 = scmp.eq.s32.totalorder %s15, 1
      %p46 = por %p44, %p45
      %p47 = scmp.ne.s32.totalorder %s39, %s42
      %p48 = scmp.eq.s32.totalorder %s15, 0
      %p49 = por %p47, %p48
      %p50 = scmp.ne.s32.totalorder %s39, %s42
      %p51 = scmp.eq.s32.totalorder %s20, 1
      %p52 = por %p50, %p51
      %p53 = scmp.ne.s32.totalorder %s42, %s43
      %p54 = scmp.eq.s32.totalorder %s20, 0
      %p55 = por %p53, %p54
      %p56 = scmp.ne.s32.totalorder %s42, %s43
      %p57 = scmp.eq.s32.totalorder %s21, 1
      %p58 = por %p56, %p57
      %p60 = scmp.ne.s32.totalorder %s43, %s59
      %p61 = scmp.eq.s32.totalorder %s21, 0
      %p62 = por %p60, %p61
      %s64 = sadd.s32 %s63, 1
      %p67 = scmp.eq.s32.totalorder %s15, 1
      %p68 = scmp.ne.s32.totalorder %s63, %s65
      %p69 = scmp.eq.s32.totalorder %s15, 0
      %p70 = por %p68, %p69
      %p71 = scmp.ne.s32.totalorder %s63, %s65
      %p72 = scmp.eq.s32.totalorder %s20, 1
      %p73 = por %p71, %p72
      %p74 = scmp.ne.s32.totalorder %s65, %s66
      %p75 = scmp.eq.s32.totalorder %s20, 0
      %p76 = por %p74, %p75
      %p77 = scmp.ne.s32.totalorder %s65, %s66
      %p78 = scmp.eq.s32.totalorder %s21, 1
      %p79 = por %p77, %p78
      %p81 = scmp.ne.s32.totalorder %s66, %s80
      %p82 = scmp.eq.s32.totalorder %s21, 0
      %p83 = por %p81, %p82
      %s85 = sadd.s32 %s84, 1
      %p88 = scmp.eq.s32.totalorder %s15, 1
      %p89 = scmp.ne.s32.totalorder %s84, %s86
      %p90 = scmp.eq.s32.totalorder %s15, 0
      %p91 = por %p89, %p90
      %p92 = scmp.ne.s32.totalorder %s84, %s86
      %p93 = scmp.eq.s32.totalorder %s20, 1
      %p94 = por %p92, %p93
      %p95 = scmp.ne.s32.totalorder %s86, %s87
      %p96 = scmp.eq.s32.totalorder %s20, 0
      %p97 = por %p95, %p96
      %p98 = scmp.ne.s32.totalorder %s86, %s87
      %p99 = scmp.eq.s32.totalorder %s21, 1
      %p100 = por %p98, %p99
      %p102 = scmp.ne.s32.totalorder %s87, %s101
      %p103 = scmp.eq.s32.totalorder %s21, 0
      %p104 = por %p102, %p103
      %s105 = ssub.s32 %s22, %s34
      %s106 = ssub.s32 %s23, %s30
      %s107 = sor.u32 %s105, %s106
      %p108 = scmp.eq.s32.totalorder %s107, 0
      %s110 = sadd.s32 %s109, 1
      %s111 = scalar_select %p108, %s109, %s110
      %p114 = pneg %p108
      %p115 = scmp.eq.s32.totalorder %s15, 1
      %p116 = por %p114, %p115
      %p117 = scmp.ne.s32.totalorder %s109, %s112
      %p118 = scmp.eq.s32.totalorder %s15, 0
      %p119 = por %p117, %p118
      %p120 = scmp.ne.s32.totalorder %s109, %s112
      %p121 = scmp.eq.s32.totalorder %s20, 1
      %p122 = por %p120, %p121
      %p123 = scmp.ne.s32.totalorder %s112, %s113
      %p124 = scmp.eq.s32.totalorder %s20, 0
      %p125 = por %p123, %p124
      %p126 = scmp.ne.s32.totalorder %s112, %s113
      %p127 = scmp.eq.s32.totalorder %s21, 1
      %p128 = por %p126, %p127
      %p130 = scmp.ne.s32.totalorder %s113, %s129
      %p131 = scmp.eq.s32.totalorder %s21, 0
      %p132 = por %p130, %p131
      %p133 = scmp.le.s32.totalorder 1, %s15
      %p134 = scmp.lt.s32.totalorder %s15, 3
      %p135 = pnand %p133, %p134
      %p136 = pneg %p135
      // Predicated region
      $region9: #{tpu_custom_call.1} parent=5 // pred_check
        _
      $region10: #{tpu_custom_call.1} parent=5 // pred_check_branch
        %138 = sbr.rel (%p135) target = $region12
      $region11: #{tpu_custom_call.1} parent=5 // pred_region
        %s139 = ssub.s32 %s15, 1
        // Predicated region
        $region13: #{tpu_custom_call.1} parent=11 // pred_check
          %p140 = pneg %p76
        $region14: #{tpu_custom_call.1} parent=11 // pred_check_branch
          %142 = sbr.rel (%p140) target = $region16
        $region15: #{tpu_custom_call.1} parent=11 // pred_region
          _
        $region16: #{tpu_custom_call.1} parent=11 // pred_fallthru
          _
        // Predicated region
        $region17: #{tpu_custom_call.1} parent=11 // pred_check
          %p143 = pneg %p97
        $region18: #{tpu_custom_call.1} parent=11 // pred_check_branch
          %145 = sbr.rel (%p143) target = $region20
        $region19: #{tpu_custom_call.1} parent=11 // pred_region
          _
        $region20: #{tpu_custom_call.1} parent=11 // pred_fallthru
          _
      $region12: #{tpu_custom_call.1} parent=5 // pred_fallthru
        _
      %p146 = scmp.lt.s32.totalorder %s15, 2
      // Predicated region
      $region21: #{tpu_custom_call.1} parent=5 // pred_check
        %p147 = pneg %p146
      $region22: #{tpu_custom_call.1} parent=5 // pred_check_branch
        %149 = sbr.rel (%p147) target = $region24
      $region23: #{tpu_custom_call.1} parent=5 // pred_region
        // Predicated region
        $region25: #{tpu_custom_call.1} parent=23 // pred_check
          %p150 = pneg %p49
        $region26: #{tpu_custom_call.1} parent=23 // pred_check_branch
          %152 = sbr.rel (%p150) target = $region28
        $region27: #{tpu_custom_call.1} parent=23 // pred_region
          %s153 = sand.u32 %s39, 1
          %s154 = scalar_lea.sflag [#allocation3], %s153
          %s155 = sand.u32 %s39, 1
          %s156 = smul.addr %s155, 64
          %s157 = scalar_lea.vmem [#allocation2], %s156
          %s158 = smul.u32 16, %s23
          %160 = vsyncadd %s154, 0
          %s161 = smul.addr %s22, 16
          %s162 = sadd.s32 %s158, %s161
          %s163 = smul.addr %s162, 4
          %s164 = scalar_lea.hbm %s0, %s163
          %s166 = sshll.u32 %s164, 4
          %s167 = int_to_ptr.hbm [resolvable:$true] %s166
          %s168 = sshll.u32 %s157, 4
          %s169 = int_to_ptr.vmem [resolvable:$true] %s168
          %171 = dma.hbm_to_vmem [thread:$0]  %s167, 1024, %s169, %s154
        $region28: #{tpu_custom_call.1} parent=23 // pred_fallthru
          _
      $region24: #{tpu_custom_call.1} parent=5 // pred_fallthru
        _
      %p172 = scmp.le.s32.totalorder 1, %s15
      %p173 = scmp.lt.s32.totalorder %s15, 3
      %p174 = pnand %p172, %p173
      %p175 = pneg %p174
      // Predicated region
      $region29: #{tpu_custom_call.1} parent=5 // pred_check
        _
      $region30: #{tpu_custom_call.1} parent=5 // pred_check_branch
        %177 = sbr.rel (%p174) target = $region32
      $region31: #{tpu_custom_call.1} parent=5 // pred_region
        %s178 = ssub.s32 %s15, 1
        %s179 = sand.u32 %s42, 1
        %s180 = scalar_lea.sflag [#allocation3], %s179
        %s181 = sand.u32 %s42, 1
        %s182 = smul.addr %s181, 64
        %s183 = scalar_lea.vmem [#allocation2], %s182
        // Predicated region
        $region33: #{tpu_custom_call.1} parent=31 // pred_check
          %p184 = pneg %p55
        $region34: #{tpu_custom_call.1} parent=31 // pred_check_branch
          %186 = sbr.rel (%p184) target = $region36
        $region35: #{tpu_custom_call.1} parent=31 // pred_region
          %188 = dma.done %s180, 1024
        $region36: #{tpu_custom_call.1} parent=31 // pred_fallthru
          _
        %s189 = sand.u32 %s42, 1
        %s190 = scalar_lea.sflag [#allocation3], %s189
        %s191 = sand.u32 %s42, 1
        %s192 = smul.addr %s191, 64
        %s193 = scalar_lea.vmem [#allocation2], %s192
        %p194 = pneg %p55
        %p195 = pneg %p52
        %p196 = pneg %p76
        %p197 = pneg %p73
        %p198 = pneg %p97
        %p199 = pneg %p94
        %p200 = pneg %p125
        %p201 = pneg %p122
        %s202 = sand.u32 %s112, 1
        %s203 = scalar_lea.sflag [#allocation4], %s202
        %s204 = sand.u32 %s112, 1
        %s205 = smul.addr %s204, 128
        %s206 = scalar_lea.vmem [#allocation5], %s205
        %s207 = smul.u32 16, %s25
        %s208 = smul.u32 16, %s25
        %v209 = vld [vmem:[%s1] sm:$0xff]
        %v210 = vld [vmem:[%s183] sm:$0xff]
        %v211 = vld [vmem:[%s183 + $0x8] sm:$0xff]
        %v212 = vld [vmem:[%s183 + $0x10] sm:$0xff]
        %v213 = vld [vmem:[%s183 + $0x18] sm:$0xff]
        %v214 = vld [vmem:[%s183 + $0x20] sm:$0xff]
        %v215 = vld [vmem:[%s183 + $0x28] sm:$0xff]
        %v216 = vld [vmem:[%s183 + $0x30] sm:$0xff]
        %v217 = vld [vmem:[%s183 + $0x38] sm:$0xff]
        %v218 = vld [vmem:[%s2] sm:$0xff]
        %220 = vset.pattern.permute.xlu0 0
        %221 = vperm.xlu0 %220, %v218
        %v222 = vpop.permute.xlu0 %221
        %232 = vst [vmem:[#allocation1] ss:$2 sm:$0xff] %v210
        %s233 = scalar_lea.vmem [#allocation1], 16
        %234 = vst [vmem:[%s233] ss:$2 sm:$0xff] %v211
        %s235 = scalar_lea.vmem [#allocation1], 32
        %236 = vst [vmem:[%s235] ss:$2 sm:$0xff] %v212
        %s237 = scalar_lea.vmem [#allocation1], 48
        %238 = vst [vmem:[%s237] ss:$2 sm:$0xff] %v213
        %v239 = vld.sshfl [vmem:[#allocation1] sm:$0xff pattern:$0x75316420]
        %v240 = vld.sshfl [vmem:[#allocation1 + $0x8] sm:$0xff pattern:$0x75316420]
        %v241 = vld.sshfl [vmem:[#allocation1 + $0x10] sm:$0xff pattern:$0x75316420]
        %v242 = vld.sshfl [vmem:[#allocation1 + $0x18] sm:$0xff pattern:$0x75316420]
        %v243 = vld.sshfl [vmem:[#allocation1 + $0x20] sm:$0xff pattern:$0x75316420]
        %v244 = vld.sshfl [vmem:[#allocation1 + $0x28] sm:$0xff pattern:$0x75316420]
        %v245 = vld.sshfl [vmem:[#allocation1 + $0x30] sm:$0xff pattern:$0x75316420]
        %v246 = vld.sshfl [vmem:[#allocation1 + $0x38] sm:$0xff pattern:$0x75316420]
        %247 = vst [vmem:[#allocation1] ss:$2 sm:$0xff] %v214
        %248 = vst [vmem:[%s233] ss:$2 sm:$0xff] %v215
        %249 = vst [vmem:[%s235] ss:$2 sm:$0xff] %v216
        %250 = vst [vmem:[%s237] ss:$2 sm:$0xff] %v217
        %v251 = vld.sshfl [vmem:[#allocation1] sm:$0xff pattern:$0x75316420]
        %v252 = vld.sshfl [vmem:[#allocation1 + $0x8] sm:$0xff pattern:$0x75316420]
        %v253 = vld.sshfl [vmem:[#allocation1 + $0x10] sm:$0xff pattern:$0x75316420]
        %v254 = vld.sshfl [vmem:[#allocation1 + $0x18] sm:$0xff pattern:$0x75316420]
        %v255 = vld.sshfl [vmem:[#allocation1 + $0x20] sm:$0xff pattern:$0x75316420]
        %v256 = vld.sshfl [vmem:[#allocation1 + $0x28] sm:$0xff pattern:$0x75316420]
        %v257 = vld.sshfl [vmem:[#allocation1 + $0x30] sm:$0xff pattern:$0x75316420]
        %v258 = vld.sshfl [vmem:[#allocation1 + $0x38] sm:$0xff pattern:$0x75316420]
        %vm259 = vcmask 31744
        %v261 = vsel %vm259, %v209, 0
        %vm263 = vcmask 1043456
        %v264 = vsel %vm263, %v239, 0
        %v266 = vsel %vm263, %v240, 0
        %v268 = vsel %vm263, %v241, 0
        %v270 = vsel %vm263, %v242, 0
        %v272 = vsel %vm263, %v243, 0
        %v274 = vsel %vm263, %v244, 0
        %v276 = vsel %vm263, %v245, 0
        %v278 = vsel %vm263, %v246, 0
        %v280 = vsel %vm263, %v251, 0
        %v282 = vsel %vm263, %v252, 0
        %v284 = vsel %vm263, %v253, 0
        %v286 = vsel %vm263, %v254, 0
        %v288 = vsel %vm263, %v255, 0
        %v290 = vsel %vm263, %v256, 0
        %v292 = vsel %vm263, %v257, 0
        %v294 = vsel %vm263, %v258, 0
        %296 = vmatpush.msra.mxu0 0.0
        %297 = vmatpush.msra.mxu0 0.0
        %298 = vmatpush.msra.mxu0 0.0
        %299 = vmatpush.msra.mxu0 0.0
        %300 = vmatpush.msra.mxu0 0.0
        %301 = vmatpush.msra.mxu0 0.0
        %302 = vmatpush.msra.mxu0 0.0
        %303 = vmatpush.msra.mxu0 0.0
        %304 = vmatpush.msra.mxu0 0.0
        %305 = vmatpush.msra.mxu0 0.0
        %306 = vmatpush.msra.mxu0 0.0
        %307 = vmatpush.msra.mxu0 0.0
        %308 = vmatpush.msra.mxu0 0.0
        %309 = vmatpush.msra.mxu0 0.0
        %310 = vmatpush.msra.mxu0 0.0
        %311 = vmatpush.msra.mxu0 %v264
        %312 = vmatmul.f32.gmra.mxu0 %v261
        %v313 = vpop.f32.mrf.mxu0
        %v314 = vadd.f32 %v222, %v313
        %315 = vdwg.mxu0
        %316 = vmatpush.msra.mxu0 0.0
        %317 = vmatpush.msra.mxu0 0.0
        %318 = vmatpush.msra.mxu0 0.0
        %319 = vmatpush.msra.mxu0 0.0
        %320 = vmatpush.msra.mxu0 0.0
        %321 = vmatpush.msra.mxu0 0.0
        %322 = vmatpush.msra.mxu0 0.0
        %323 = vmatpush.msra.mxu0 0.0
        %324 = vmatpush.msra.mxu0 0.0
        %325 = vmatpush.msra.mxu0 0.0
        %326 = vmatpush.msra.mxu0 0.0
        %327 = vmatpush.msra.mxu0 0.0
        %328 = vmatpush.msra.mxu0 0.0
        %329 = vmatpush.msra.mxu0 0.0
        %330 = vmatpush.msra.mxu0 0.0
        %331 = vmatpush.msra.mxu0 %v266
        %332 = vmatmul.f32.gmra.mxu0 %v261
        %v333 = vpop.f32.mrf.mxu0
        %v334 = vadd.f32 %v222, %v333
        %335 = vdwg.mxu0
        %336 = vmatpush.msra.mxu0 0.0
        %337 = vmatpush.msra.mxu0 0.0
        %338 = vmatpush.msra.mxu0 0.0
        %339 = vmatpush.msra.mxu0 0.0
        %340 = vmatpush.msra.mxu0 0.0
        %341 = vmatpush.msra.mxu0 0.0
        %342 = vmatpush.msra.mxu0 0.0
        %343 = vmatpush.msra.mxu0 0.0
        %344 = vmatpush.msra.mxu0 0.0
        %345 = vmatpush.msra.mxu0 0.0
        %346 = vmatpush.msra.mxu0 0.0
        %347 = vmatpush.msra.mxu0 0.0
        %348 = vmatpush.msra.mxu0 0.0
        %349 = vmatpush.msra.mxu0 0.0
        %350 = vmatpush.msra.mxu0 0.0
        %351 = vmatpush.msra.mxu0 %v268
        %352 = vmatmul.f32.gmra.mxu0 %v261
        %v353 = vpop.f32.mrf.mxu0
        %v354 = vadd.f32 %v222, %v353
        %355 = vdwg.mxu0
        %356 = vmatpush.msra.mxu0 0.0
        %357 = vmatpush.msra.mxu0 0.0
        %358 = vmatpush.msra.mxu0 0.0
        %359 = vmatpush.msra.mxu0 0.0
        %360 = vmatpush.msra.mxu0 0.0
        %361 = vmatpush.msra.mxu0 0.0
        %362 = vmatpush.msra.mxu0 0.0
        %363 = vmatpush.msra.mxu0 0.0
        %364 = vmatpush.msra.mxu0 0.0
        %365 = vmatpush.msra.mxu0 0.0
        %366 = vmatpush.msra.mxu0 0.0
        %367 = vmatpush.msra.mxu0 0.0
        %368 = vmatpush.msra.mxu0 0.0
        %369 = vmatpush.msra.mxu0 0.0
        %370 = vmatpush.msra.mxu0 0.0
        %371 = vmatpush.msra.mxu0 %v270
        %372 = vmatmul.f32.gmra.mxu0 %v261
        %v373 = vpop.f32.mrf.mxu0
        %v374 = vadd.f32 %v222, %v373
        %375 = vdwg.mxu0
        %376 = vmatpush.msra.mxu0 0.0
        %377 = vmatpush.msra.mxu0 0.0
        %378 = vmatpush.msra.mxu0 0.0
        %379 = vmatpush.msra.mxu0 0.0
        %380 = vmatpush.msra.mxu0 0.0
        %381 = vmatpush.msra.mxu0 0.0
        %382 = vmatpush.msra.mxu0 0.0
        %383 = vmatpush.msra.mxu0 0.0
        %384 = vmatpush.msra.mxu0 0.0
        %385 = vmatpush.msra.mxu0 0.0
        %386 = vmatpush.msra.mxu0 0.0
        %387 = vmatpush.msra.mxu0 0.0
        %388 = vmatpush.msra.mxu0 0.0
        %389 = vmatpush.msra.mxu0 0.0
        %390 = vmatpush.msra.mxu0 0.0
        %391 = vmatpush.msra.mxu0 %v272
        %392 = vmatmul.f32.gmra.mxu0 %v261
        %v393 = vpop.f32.mrf.mxu0
        %v394 = vadd.f32 %v222, %v393
        %395 = vdwg.mxu0
        %396 = vmatpush.msra.mxu0 0.0
        %397 = vmatpush.msra.mxu0 0.0
        %398 = vmatpush.msra.mxu0 0.0
        %399 = vmatpush.msra.mxu0 0.0
        %400 = vmatpush.msra.mxu0 0.0
        %401 = vmatpush.msra.mxu0 0.0
        %402 = vmatpush.msra.mxu0 0.0
        %403 = vmatpush.msra.mxu0 0.0
        %404 = vmatpush.msra.mxu0 0.0
        %405 = vmatpush.msra.mxu0 0.0
        %406 = vmatpush.msra.mxu0 0.0
        %407 = vmatpush.msra.mxu0 0.0
        %408 = vmatpush.msra.mxu0 0.0
        %409 = vmatpush.msra.mxu0 0.0
        %410 = vmatpush.msra.mxu0 0.0
        %411 = vmatpush.msra.mxu0 %v274
        %412 = vmatmul.f32.gmra.mxu0 %v261
        %v413 = vpop.f32.mrf.mxu0
        %v414 = vadd.f32 %v222, %v413
        %415 = vdwg.mxu0
        %416 = vmatpush.msra.mxu0 0.0
        %417 = vmatpush.msra.mxu0 0.0
        %418 = vmatpush.msra.mxu0 0.0
        %419 = vmatpush.msra.mxu0 0.0
        %420 = vmatpush.msra.mxu0 0.0
        %421 = vmatpush.msra.mxu0 0.0
        %422 = vmatpush.msra.mxu0 0.0
        %423 = vmatpush.msra.mxu0 0.0
        %424 = vmatpush.msra.mxu0 0.0
        %425 = vmatpush.msra.mxu0 0.0
        %426 = vmatpush.msra.mxu0 0.0
        %427 = vmatpush.msra.mxu0 0.0
        %428 = vmatpush.msra.mxu0 0.0
        %429 = vmatpush.msra.mxu0 0.0
        %430 = vmatpush.msra.mxu0 0.0
        %431 = vmatpush.msra.mxu0 %v276
        %432 = vmatmul.f32.gmra.mxu0 %v261
        %v433 = vpop.f32.mrf.mxu0
        %v434 = vadd.f32 %v222, %v433
        %435 = vdwg.mxu0
        %436 = vmatpush.msra.mxu0 0.0
        %437 = vmatpush.msra.mxu0 0.0
        %438 = vmatpush.msra.mxu0 0.0
        %439 = vmatpush.msra.mxu0 0.0
        %440 = vmatpush.msra.mxu0 0.0
        %441 = vmatpush.msra.mxu0 0.0
        %442 = vmatpush.msra.mxu0 0.0
        %443 = vmatpush.msra.mxu0 0.0
        %444 = vmatpush.msra.mxu0 0.0
        %445 = vmatpush.msra.mxu0 0.0
        %446 = vmatpush.msra.mxu0 0.0
        %447 = vmatpush.msra.mxu0 0.0
        %448 = vmatpush.msra.mxu0 0.0
        %449 = vmatpush.msra.mxu0 0.0
        %450 = vmatpush.msra.mxu0 0.0
        %451 = vmatpush.msra.mxu0 %v278
        %452 = vmatmul.f32.gmra.mxu0 %v261
        %v453 = vpop.f32.mrf.mxu0
        %v454 = vadd.f32 %v222, %v453
        %455 = vdwg.mxu0
        %456 = vmatpush.msra.mxu0 0.0
        %457 = vmatpush.msra.mxu0 0.0
        %458 = vmatpush.msra.mxu0 0.0
        %459 = vmatpush.msra.mxu0 0.0
        %460 = vmatpush.msra.mxu0 0.0
        %461 = vmatpush.msra.mxu0 0.0
        %462 = vmatpush.msra.mxu0 0.0
        %463 = vmatpush.msra.mxu0 0.0
        %464 = vmatpush.msra.mxu0 0.0
        %465 = vmatpush.msra.mxu0 0.0
        %466 = vmatpush.msra.mxu0 0.0
        %467 = vmatpush.msra.mxu0 0.0
        %468 = vmatpush.msra.mxu0 0.0
        %469 = vmatpush.msra.mxu0 0.0
        %470 = vmatpush.msra.mxu0 0.0
        %471 = vmatpush.msra.mxu0 %v280
        %472 = vmatmul.f32.gmra.mxu0 %v261
        %v473 = vpop.f32.mrf.mxu0
        %v474 = vadd.f32 %v222, %v473
        %475 = vdwg.mxu0
        %476 = vmatpush.msra.mxu0 0.0
        %477 = vmatpush.msra.mxu0 0.0
        %478 = vmatpush.msra.mxu0 0.0
        %479 = vmatpush.msra.mxu0 0.0
        %480 = vmatpush.msra.mxu0 0.0
        %481 = vmatpush.msra.mxu0 0.0
        %482 = vmatpush.msra.mxu0 0.0
        %483 = vmatpush.msra.mxu0 0.0
        %484 = vmatpush.msra.mxu0 0.0
        %485 = vmatpush.msra.mxu0 0.0
        %486 = vmatpush.msra.mxu0 0.0
        %487 = vmatpush.msra.mxu0 0.0
        %488 = vmatpush.msra.mxu0 0.0
        %489 = vmatpush.msra.mxu0 0.0
        %490 = vmatpush.msra.mxu0 0.0
        %491 = vmatpush.msra.mxu0 %v282
        %492 = vmatmul.f32.gmra.mxu0 %v261
        %v493 = vpop.f32.mrf.mxu0
        %v494 = vadd.f32 %v222, %v493
        %495 = vdwg.mxu0
        %496 = vmatpush.msra.mxu0 0.0
        %497 = vmatpush.msra.mxu0 0.0
        %498 = vmatpush.msra.mxu0 0.0
        %499 = vmatpush.msra.mxu0 0.0
        %500 = vmatpush.msra.mxu0 0.0
        %501 = vmatpush.msra.mxu0 0.0
        %502 = vmatpush.msra.mxu0 0.0
        %503 = vmatpush.msra.mxu0 0.0
        %504 = vmatpush.msra.mxu0 0.0
        %505 = vmatpush.msra.mxu0 0.0
        %506 = vmatpush.msra.mxu0 0.0
        %507 = vmatpush.msra.mxu0 0.0
        %508 = vmatpush.msra.mxu0 0.0
        %509 = vmatpush.msra.mxu0 0.0
        %510 = vmatpush.msra.mxu0 0.0
        %511 = vmatpush.msra.mxu0 %v284
        %512 = vmatmul.f32.gmra.mxu0 %v261
        %v513 = vpop.f32.mrf.mxu0
        %v514 = vadd.f32 %v222, %v513
        %515 = vdwg.mxu0
        %516 = vmatpush.msra.mxu0 0.0
        %517 = vmatpush.msra.mxu0 0.0
        %518 = vmatpush.msra.mxu0 0.0
        %519 = vmatpush.msra.mxu0 0.0
        %520 = vmatpush.msra.mxu0 0.0
        %521 = vmatpush.msra.mxu0 0.0
        %522 = vmatpush.msra.mxu0 0.0
        %523 = vmatpush.msra.mxu0 0.0
        %524 = vmatpush.msra.mxu0 0.0
        %525 = vmatpush.msra.mxu0 0.0
        %526 = vmatpush.msra.mxu0 0.0
        %527 = vmatpush.msra.mxu0 0.0
        %528 = vmatpush.msra.mxu0 0.0
        %529 = vmatpush.msra.mxu0 0.0
        %530 = vmatpush.msra.mxu0 0.0
        %531 = vmatpush.msra.mxu0 %v286
        %532 = vmatmul.f32.gmra.mxu0 %v261
        %v533 = vpop.f32.mrf.mxu0
        %v534 = vadd.f32 %v222, %v533
        %535 = vdwg.mxu0
        %536 = vmatpush.msra.mxu0 0.0
        %537 = vmatpush.msra.mxu0 0.0
        %538 = vmatpush.msra.mxu0 0.0
        %539 = vmatpush.msra.mxu0 0.0
        %540 = vmatpush.msra.mxu0 0.0
        %541 = vmatpush.msra.mxu0 0.0
        %542 = vmatpush.msra.mxu0 0.0
        %543 = vmatpush.msra.mxu0 0.0
        %544 = vmatpush.msra.mxu0 0.0
        %545 = vmatpush.msra.mxu0 0.0
        %546 = vmatpush.msra.mxu0 0.0
        %547 = vmatpush.msra.mxu0 0.0
        %548 = vmatpush.msra.mxu0 0.0
        %549 = vmatpush.msra.mxu0 0.0
        %550 = vmatpush.msra.mxu0 0.0
        %551 = vmatpush.msra.mxu0 %v288
        %552 = vmatmul.f32.gmra.mxu0 %v261
        %v553 = vpop.f32.mrf.mxu0
        %v554 = vadd.f32 %v222, %v553
        %555 = vdwg.mxu0
        %556 = vmatpush.msra.mxu0 0.0
        %557 = vmatpush.msra.mxu0 0.0
        %558 = vmatpush.msra.mxu0 0.0
        %559 = vmatpush.msra.mxu0 0.0
        %560 = vmatpush.msra.mxu0 0.0
        %561 = vmatpush.msra.mxu0 0.0
        %562 = vmatpush.msra.mxu0 0.0
        %563 = vmatpush.msra.mxu0 0.0
        %564 = vmatpush.msra.mxu0 0.0
        %565 = vmatpush.msra.mxu0 0.0
        %566 = vmatpush.msra.mxu0 0.0
        %567 = vmatpush.msra.mxu0 0.0
        %568 = vmatpush.msra.mxu0 0.0
        %569 = vmatpush.msra.mxu0 0.0
        %570 = vmatpush.msra.mxu0 0.0
        %571 = vmatpush.msra.mxu0 %v290
        %572 = vmatmul.f32.gmra.mxu0 %v261
        %v573 = vpop.f32.mrf.mxu0
        %v574 = vadd.f32 %v222, %v573
        %575 = vdwg.mxu0
        %576 = vmatpush.msra.mxu0 0.0
        %577 = vmatpush.msra.mxu0 0.0
        %578 = vmatpush.msra.mxu0 0.0
        %579 = vmatpush.msra.mxu0 0.0
        %580 = vmatpush.msra.mxu0 0.0
        %581 = vmatpush.msra.mxu0 0.0
        %582 = vmatpush.msra.mxu0 0.0
        %583 = vmatpush.msra.mxu0 0.0
        %584 = vmatpush.msra.mxu0 0.0
        %585 = vmatpush.msra.mxu0 0.0
        %586 = vmatpush.msra.mxu0 0.0
        %587 = vmatpush.msra.mxu0 0.0
        %588 = vmatpush.msra.mxu0 0.0
        %589 = vmatpush.msra.mxu0 0.0
        %590 = vmatpush.msra.mxu0 0.0
        %591 = vmatpush.msra.mxu0 %v292
        %592 = vmatmul.f32.gmra.mxu0 %v261
        %v593 = vpop.f32.mrf.mxu0
        %v594 = vadd.f32 %v222, %v593
        %595 = vdwg.mxu0
        %596 = vmatpush.msra.mxu0 0.0
        %597 = vmatpush.msra.mxu0 0.0
        %598 = vmatpush.msra.mxu0 0.0
        %599 = vmatpush.msra.mxu0 0.0
        %600 = vmatpush.msra.mxu0 0.0
        %601 = vmatpush.msra.mxu0 0.0
        %602 = vmatpush.msra.mxu0 0.0
        %603 = vmatpush.msra.mxu0 0.0
        %604 = vmatpush.msra.mxu0 0.0
        %605 = vmatpush.msra.mxu0 0.0
        %606 = vmatpush.msra.mxu0 0.0
        %607 = vmatpush.msra.mxu0 0.0
        %608 = vmatpush.msra.mxu0 0.0
        %609 = vmatpush.msra.mxu0 0.0
        %610 = vmatpush.msra.mxu0 0.0
        %611 = vmatpush.msra.mxu0 %v294
        %612 = vmatmul.f32.gmra.mxu0 %v261
        %v613 = vpop.f32.mrf.mxu0
        %v614 = vadd.f32 %v222, %v613
        %615 = vdwg.mxu0
        %v616 = vmax.f32 %v314, 0.0
        %v617 = vmax.f32 %v334, 0.0
        %v618 = vmax.f32 %v354, 0.0
        %v619 = vmax.f32 %v374, 0.0
        %v620 = vmax.f32 %v394, 0.0
        %v621 = vmax.f32 %v414, 0.0
        %v622 = vmax.f32 %v434, 0.0
        %v623 = vmax.f32 %v454, 0.0
        %v624 = vmax.f32 %v474, 0.0
        %v625 = vmax.f32 %v494, 0.0
        %v626 = vmax.f32 %v514, 0.0
        %v627 = vmax.f32 %v534, 0.0
        %v628 = vmax.f32 %v554, 0.0
        %v629 = vmax.f32 %v574, 0.0
        %v630 = vmax.f32 %v594, 0.0
        %v631 = vmax.f32 %v614, 0.0
        %632 = vst [vmem:[%s206] sm:$0xff] %v616
        %633 = vst [vmem:[%s206 + $0x8] sm:$0xff] %v617
        %634 = vst [vmem:[%s206 + $0x10] sm:$0xff] %v618
        %635 = vst [vmem:[%s206 + $0x18] sm:$0xff] %v619
        %636 = vst [vmem:[%s206 + $0x20] sm:$0xff] %v620
        %637 = vst [vmem:[%s206 + $0x28] sm:$0xff] %v621
        %638 = vst [vmem:[%s206 + $0x30] sm:$0xff] %v622
        %639 = vst [vmem:[%s206 + $0x38] sm:$0xff] %v623
        %640 = vst [vmem:[%s206 + $0x40] sm:$0xff] %v624
        %641 = vst [vmem:[%s206 + $0x48] sm:$0xff] %v625
        %642 = vst [vmem:[%s206 + $0x50] sm:$0xff] %v626
        %643 = vst [vmem:[%s206 + $0x58] sm:$0xff] %v627
        %644 = vst [vmem:[%s206 + $0x60] sm:$0xff] %v628
        %645 = vst [vmem:[%s206 + $0x68] sm:$0xff] %v629
        %646 = vst [vmem:[%s206 + $0x70] sm:$0xff] %v630
        %647 = vst [vmem:[%s206 + $0x78] sm:$0xff] %v631
        %s648 = sand.u32 %s112, 1
        %s649 = scalar_lea.sflag [#allocation4], %s648
        %s650 = sand.u32 %s112, 1
        %s651 = smul.addr %s650, 128
        %s652 = scalar_lea.vmem [#allocation5], %s651
        // Predicated region
        $region37: #{tpu_custom_call.1} parent=31 // pred_check
          %p653 = pneg %p122
        $region38: #{tpu_custom_call.1} parent=31 // pred_check_branch
          %655 = sbr.rel (%p653) target = $region40
        $region39: #{tpu_custom_call.1} parent=31 // pred_region
          %s656 = smul.u32 16, %s25
          %658 = vsyncadd %s649, 0
          %s659 = smul.addr %s24, 16
          %s660 = sadd.s32 %s656, %s659
          %s661 = smul.addr %s660, 8
          %s662 = scalar_lea.hbm %s3, %s661
          %s664 = sshll.u32 %s652, 4
          %s665 = int_to_ptr.vmem [resolvable:$true] %s664
          %s666 = sshll.u32 %s662, 4
          %s667 = int_to_ptr.hbm [resolvable:$true] %s666
          %669 = dma.vmem_to_hbm [thread:$0]  %s665, 2048, %s667, %s649
        $region40: #{tpu_custom_call.1} parent=31 // pred_fallthru
          _
      $region32: #{tpu_custom_call.1} parent=5 // pred_fallthru
        _
      %p670 = scmp.le.s32.totalorder 2, %s15
      // Predicated region
      $region41: #{tpu_custom_call.1} parent=5 // pred_check
        %p671 = pneg %p670
      $region42: #{tpu_custom_call.1} parent=5 // pred_check_branch
        %673 = sbr.rel (%p671) target = $region44
      $region43: #{tpu_custom_call.1} parent=5 // pred_region
        %s674 = ssub.s32 %s15, 2
        // Predicated region
        $region45: #{tpu_custom_call.1} parent=43 // pred_check
          %p675 = pneg %p128
        $region46: #{tpu_custom_call.1} parent=43 // pred_check_branch
          %677 = sbr.rel (%p675) target = $region48
        $region47: #{tpu_custom_call.1} parent=43 // pred_region
          %s678 = sand.u32 %s113, 1
          %s679 = scalar_lea.sflag [#allocation4], %s678
          %s680 = sand.u32 %s113, 1
          %s681 = smul.addr %s680, 128
          %s682 = scalar_lea.vmem [#allocation5], %s681
          %684 = dma.done %s679, 2048
        $region48: #{tpu_custom_call.1} parent=43 // pred_fallthru
          _
      $region44: #{tpu_custom_call.1} parent=5 // pred_fallthru
        _
    $region6: #{tpu_custom_call.1} parent=1 // loop_footer
      %s19 = sadd.s32 1, %s15
    $region7: #{tpu_custom_call.1} parent=1 // loop_footer_branch
      %14 = sbr.rel target = $region3
    $region8: #{tpu_custom_call.1} parent=1 // loop_exit
      _
    %685 = vsyncpa [#allocation3], 1
    %s686 = scalar_lea.sflag [#allocation3], 1
    %687 = vsyncpa %s686, 1
    %688 = vsyncpa [#allocation4], 1
    %s689 = scalar_lea.sflag [#allocation4], 1
    %690 = vsyncpa %s689, 1

</llo_original>
